<compile_context>
chip_gen: v5e
topology: v5e:2x2
jax: 0.10.0
libtpu: 0.0.40
codegen_flags: <defaults>
</compile_context>

<pallas_src>
import functools
import math

import jax
import jax.numpy as jnp
from jax import lax
from jax.experimental import pallas as pl
from jax.experimental.pallas import tpu as pltpu


# ---------------------------------------------------------------------------
# Parameter sampling (pure JAX; mirrors torchvision v2 RandomErasing).
# ---------------------------------------------------------------------------
def _sample_erase_params(key, H, W, p, scale, ratio, n_tries=10):
    """Returns (do_erase: bool[], top, left, h, w: int32[])."""
    k_apply, k_area, k_ratio, k_i, k_j = jax.random.split(key, 5)

    apply_flag = jax.random.uniform(k_apply) < p

    area = float(H * W)
    erase_area = area * jax.random.uniform(
        k_area, (n_tries,), minval=scale[0], maxval=scale[1]
    )
    log_ratio = jax.random.uniform(
        k_ratio, (n_tries,), minval=math.log(ratio[0]), maxval=math.log(ratio[1])
    )
    aspect = jnp.exp(log_ratio)

    h_cand = jnp.round(jnp.sqrt(erase_area * aspect)).astype(jnp.int32)
    w_cand = jnp.round(jnp.sqrt(erase_area / aspect)).astype(jnp.int32)

    valid = (h_cand > 0) & (w_cand > 0) & (h_cand < H) & (w_cand < W)
    any_valid = jnp.any(valid)
    first_valid = jnp.argmax(valid)  # first True index (0 if none)

    # Clamp so randint bounds stay valid even when no candidate is valid
    # (do_erase masks the result off in that case).
    h_sel = jnp.clip(h_cand[first_valid], 1, max(H - 1, 1)).astype(jnp.int32)
    w_sel = jnp.clip(w_cand[first_valid], 1, max(W - 1, 1)).astype(jnp.int32)

    top = jax.random.randint(k_i, (), 0, H - h_sel + 1, dtype=jnp.int32)
    left = jax.random.randint(k_j, (), 0, W - w_sel + 1, dtype=jnp.int32)

    do_erase = apply_flag & any_valid
    return do_erase, top, left, h_sel, w_sel


# ---------------------------------------------------------------------------
# Tiling heuristic.
# ---------------------------------------------------------------------------
def _sublane_pack(itemsize):
    # Second-to-last block dim alignment: 8 for 4-byte, 16 for 2-byte, 32 for 1B.
    return 8 * max(1, 4 // itemsize)


def _choose_tiles(nc, H, W, itemsize):
    pack = _sublane_pack(itemsize)
    tile_h = H if H <= pack else pack
    row_bytes = tile_h * W * itemsize

    # Grow tile_nc first (no over-read along H), target a few-MiB block.
    tile_nc = int(max(1, min(nc, (4 << 20) // max(row_bytes, 1))))
    if nc >= 2:
        # Keep >=2 steps on the 'parallel' nc axis (megacore / 2 TCs on v7x).
        tile_nc = min(tile_nc, (nc + 1) // 2)

    # If the block is still small (few planes), grow tile_h to amortize the
    # ~0.35us/step overhead; stays a multiple of `pack` or becomes full H.
    while tile_h < H and tile_nc * tile_h * W * itemsize < (1 << 20):
        tile_h = H if tile_h + pack >= H else tile_h + pack
    return tile_nc, tile_h


# ---------------------------------------------------------------------------
# Kernel: masked rewrite of the row blocks overlapping the erase rectangle.
# ---------------------------------------------------------------------------
def _erase_rect_kernel(params_ref, x_ref, o_ref):
    # params (SMEM, int32): [first_blk, last_blk, top, left, h, w]
    _, th, tw = x_ref.shape
    rb = jnp.minimum(params_ref[0] + pl.program_id(1), params_ref[1])
    row0 = rb * th

    top, left = params_ref[2], params_ref[3]
    h, w = params_ref[4], params_ref[5]

    rows = row0 + lax.broadcasted_iota(jnp.int32, (th, tw), 0)
    cols = lax.broadcasted_iota(jnp.int32, (th, tw), 1)
    erase = (rows >= top) & (rows < top + h) & (cols >= left) & (cols < left + w)

    x = x_ref[...]
    # jnp.where keeps exact-zero semantics inside the erased rectangle.
    o_ref[...] = jnp.where(erase[None, :, :], jnp.zeros((), x.dtype), x)


# ---------------------------------------------------------------------------
# Forward pass.
# ---------------------------------------------------------------------------
def stable_random_erasing(img, key, p=0.1, scale=(0.02, 0.12), ratio=(0.3, 3.0)):
    """StableRandomErasing forward. img: NCHW. One rectangle per call (batched
    torchvision-v2 semantics). For the fully in-place fast path, jit this
    function with donate_argnums=0."""
    N, C, H, W = img.shape
    nc = N * C
    itemsize = jnp.dtype(img.dtype).itemsize

    do_erase, top, left, h_sel, w_sel = _sample_erase_params(
        key, H, W, p, scale, ratio
    )
    h_eff = jnp.where(do_erase, h_sel, 0).astype(jnp.int32)
    w_eff = jnp.where(do_erase, w_sel, 0).astype(jnp.int32)

    tile_nc, tile_h = _choose_tiles(nc, H, W, itemsize)
    nc_steps = int(pl.cdiv(nc, tile_nc))
    n_row_blocks = int(pl.cdiv(H, tile_h))

    # Static worst-case number of row blocks any sampled rectangle can span.
    h_max = min(max(H - 1, 1),
                int(math.floor(math.sqrt(scale[1] * ratio[1] * H * W))) + 1)
    row_steps = int(min(n_row_blocks, pl.cdiv(h_max, tile_h) + 1))

    first_rb = (top // tile_h).astype(jnp.int32)
    last_rb = jnp.maximum(first_rb, (top + h_eff - 1) // tile_h).astype(jnp.int32)
    last_rb = jnp.minimum(last_rb, n_row_blocks - 1)
    params = jnp.stack([first_rb, last_rb, top, left, h_eff, w_eff]).astype(jnp.int32)

    flat = img.reshape(nc, H, W)

    def img_index_map(i, r, prm):
        # Clamp trailing grid steps onto the last covered block: consecutive
        # identical indices keep the block resident (no extra HBM traffic).
        return (i, jnp.minimum(prm[0] + r, prm[1]), 0)

    block = (tile_nc, tile_h, W)
    block_bytes = tile_nc * tile_h * W * itemsize
    vmem_bytes = int(min(48 << 20, max(16 << 20, 4 * block_bytes + (2 << 20))))

    out_flat = pl.pallas_call(
        _erase_rect_kernel,
        out_shape=jax.ShapeDtypeStruct((nc, H, W), img.dtype),
        grid_spec=pltpu.PrefetchScalarGridSpec(
            num_scalar_prefetch=1,
            grid=(nc_steps, row_steps),
            in_specs=[pl.BlockSpec(block, img_index_map)],
            out_specs=pl.BlockSpec(block, img_index_map),
        ),
        # Alias image -> output: untouched blocks keep their values; with a
        # donated input the whole pass is in-place (no defensive copy).
        input_output_aliases={1: 0},
        compiler_params=pltpu.CompilerParams(
            dimension_semantics=("parallel", "arbitrary"),
            vmem_limit_bytes=vmem_bytes,
        ),
    )(params, flat)

    return out_flat.reshape(N, C, H, W)


# ---------------------------------------------------------------------------
# Pure-JAX reference (for testing).
# ---------------------------------------------------------------------------
def _reference(img, key, p=0.1, scale=(0.02, 0.12), ratio=(0.3, 3.0)):
    N, C, H, W = img.shape
    do_erase, top, left, h, w = _sample_erase_params(key, H, W, p, scale, ratio)
    rows = jnp.arange(H, dtype=jnp.int32)[:, None]
    cols = jnp.arange(W, dtype=jnp.int32)[None, :]
    rect = (rows >= top) & (rows < top + h) & (cols >= left) & (cols < left + w)
    rect = rect & do_erase
    return jnp.where(rect[None, None, :, :], jnp.zeros((), img.dtype), img)


if __name__ == "__main__":
    key = jax.random.PRNGKey(0)
    k_img, k_erase = jax.random.split(key)

    # Small deterministic example: batch=2, channels=4, spatial=16x16.
    x = jax.random.normal(k_img, (2, 4, 16, 16), dtype=jnp.float32)

    fn = jax.jit(stable_random_erasing, static_argnames=("p", "scale", "ratio"))

    # p=1.0 -> erase always fires; compare bit-exactly against pure-JAX ref.
    y = jax.block_until_ready(fn(x, k_erase, p=1.0))
    ref = jax.block_until_ready(_reference(x, k_erase, p=1.0))
    assert y.shape == x.shape and y.dtype == x.dtype
    assert bool(jnp.all(y == ref))
    assert bool(jnp.any(y != x))  # a rectangle was actually erased
    changed = jnp.logical_and(y != x, y != 0.0)
    assert not bool(jnp.any(changed))  # only zeroed pixels differ

    # p=0.0 -> exact identity (no-erase path rewrites one block unchanged).
    y_id = jax.block_until_ready(fn(x, k_erase, p=0.0))
    assert bool(jnp.all(y_id == x))

    # Donated-input production path: fully in-place rectangle write.
    fn_donate = jax.jit(
        stable_random_erasing,
        static_argnames=("p", "scale", "ratio"),
        donate_argnums=(0,),
    )
    y_don = jax.block_until_ready(fn_donate(x + 0.0, k_erase, p=1.0))
    assert bool(jnp.all(y_don == ref))

    print("KERNEL_OK")
</pallas_src>

<mosaic_0001>
module attributes {stable_mosaic.version = 11 : i64} {
  func.func @_erase_rect_kernel(%arg0: i32, %arg1: i32, %arg2: memref<6xi32, #tpu.memory_space<smem>>, %arg3: memref<4x16x16xf32, #tpu.memory_space<vmem>>, %arg4: memref<4x16x16xf32, #tpu.memory_space<vmem>>) attributes {dimension_semantics = [#tpu.dimension_semantics<parallel>, #tpu.dimension_semantics<arbitrary>], iteration_bounds = array<i64: 2, 1>, scalar_prefetch = 1 : i64, scratch_operands = 0 : i64, tpu.core_type = #tpu.core_type<tc>, window_params = [{transform_indices = @transform_0, window_bounds = array<i64: 4, 16, 16>}, {transform_indices = @transform_1, window_bounds = array<i64: 4, 16, 16>}]} {
    %c0 = arith.constant 0 : index
    %0 = memref.load %arg2[%c0] : memref<6xi32, #tpu.memory_space<smem>>
    %1 = arith.addi %0, %arg1 : i32
    %c1 = arith.constant 1 : index
    %2 = memref.load %arg2[%c1] : memref<6xi32, #tpu.memory_space<smem>>
    %3 = arith.minsi %1, %2 : i32
    %c16_i32 = arith.constant 16 : i32
    %4 = arith.muli %3, %c16_i32 : i32
    %c2 = arith.constant 2 : index
    %5 = memref.load %arg2[%c2] : memref<6xi32, #tpu.memory_space<smem>>
    %c3 = arith.constant 3 : index
    %6 = memref.load %arg2[%c3] : memref<6xi32, #tpu.memory_space<smem>>
    %c4 = arith.constant 4 : index
    %7 = memref.load %arg2[%c4] : memref<6xi32, #tpu.memory_space<smem>>
    %c5 = arith.constant 5 : index
    %8 = memref.load %arg2[%c5] : memref<6xi32, #tpu.memory_space<smem>>
    %9 = tpu.iota {dimensions = array<i32: 0>} : vector<16x16xi32>
    %10 = vector.broadcast %4 : i32 to vector<16x16xi32>
    %11 = arith.addi %10, %9 : vector<16x16xi32>
    %12 = tpu.iota {dimensions = array<i32: 1>} : vector<16x16xi32>
    %13 = vector.broadcast %5 : i32 to vector<16x16xi32>
    %14 = arith.cmpi sge, %11, %13 : vector<16x16xi32>
    %15 = arith.addi %5, %7 : i32
    %16 = vector.broadcast %15 : i32 to vector<16x16xi32>
    %17 = arith.cmpi slt, %11, %16 : vector<16x16xi32>
    %18 = arith.andi %14, %17 : vector<16x16xi1>
    %19 = vector.broadcast %6 : i32 to vector<16x16xi32>
    %20 = arith.cmpi sge, %12, %19 : vector<16x16xi32>
    %21 = arith.andi %18, %20 : vector<16x16xi1>
    %22 = arith.addi %6, %8 : i32
    %23 = vector.broadcast %22 : i32 to vector<16x16xi32>
    %24 = arith.cmpi slt, %12, %23 : vector<16x16xi32>
    %25 = arith.andi %21, %24 : vector<16x16xi1>
    %c0_0 = arith.constant 0 : index
    %c0_1 = arith.constant 0 : index
    %c0_2 = arith.constant 0 : index
    %26 = vector.load %arg3[%c0_0, %c0_1, %c0_2] : memref<4x16x16xf32, #tpu.memory_space<vmem>>, vector<4x16x16xf32>
    %27 = vector.shape_cast %25 : vector<16x16xi1> to vector<1x16x16xi1>
    %cst = arith.constant 0.000000e+00 : f32
    %28 = vector.shape_cast %27 : vector<1x16x16xi1> to vector<1x16x16xi1>
    %29 = vector.broadcast %28 : vector<1x16x16xi1> to vector<4x16x16xi1>
    %30 = vector.broadcast %cst : f32 to vector<4x16x16xf32>
    %31 = arith.select %29, %30, %26 : vector<4x16x16xi1>, vector<4x16x16xf32>
    %c0_3 = arith.constant 0 : index
    %c0_4 = arith.constant 0 : index
    %c0_5 = arith.constant 0 : index
    %32 = vector.load %arg4[%c0_3, %c0_4, %c0_5] : memref<4x16x16xf32, #tpu.memory_space<vmem>>, vector<4x16x16xf32>
    tpu.vector_store %arg4[%c0_3, %c0_4, %c0_5], %31 {strides = array<i32>} : memref<4x16x16xf32, #tpu.memory_space<vmem>>, vector<4x16x16xf32>,
    return
  }
  func.func @transform_0(%arg0: i32, %arg1: i32, %arg2: memref<6xi32, #tpu.memory_space<smem>>) -> (i32, i32, i32) {
    %c0 = arith.constant 0 : index
    %0 = memref.load %arg2[%c0] : memref<6xi32, #tpu.memory_space<smem>>
    %1 = arith.addi %0, %arg1 : i32
    %c1 = arith.constant 1 : index
    %2 = memref.load %arg2[%c1] : memref<6xi32, #tpu.memory_space<smem>>
    %3 = arith.minsi %1, %2 : i32
    %c0_i32 = arith.constant 0 : i32
    %c0_i32_0 = arith.constant 0 : i32
    return %arg0, %3, %c0_i32 : i32, i32, i32
  }
  func.func @transform_1(%arg0: i32, %arg1: i32, %arg2: memref<6xi32, #tpu.memory_space<smem>>) -> (i32, i32, i32) {
    %c0 = arith.constant 0 : index
    %0 = memref.load %arg2[%c0] : memref<6xi32, #tpu.memory_space<smem>>
    %1 = arith.addi %0, %arg1 : i32
    %c1 = arith.constant 1 : index
    %2 = memref.load %arg2[%c1] : memref<6xi32, #tpu.memory_space<smem>>
    %3 = arith.minsi %1, %2 : i32
    %c0_i32 = arith.constant 0 : i32
    %c0_i32_0 = arith.constant 0 : i32
    return %arg0, %3, %c0_i32 : i32, i32, i32
  }
}

</mosaic_0001>

<llo_original>
// kernel: stable_random_erasing.1
$region0: #{stable_random_erasing.1}
  #allocation0 [shape = 'u32[]', space=smem, size = 0x4, offset = 0x4, fixed_abs, tag = 'smem constant byte address 0x4 - core index']
  #allocation1 [shape = 'u32[72,128]{1,0:T(1,128)}', space=vmem, size = 0x9000, scoped, tag = 'internal scratch']
  #allocation2 [shape = 's32[1]{0}', space=sflag, size = 0x4, scoped, tag = 'scoped memory for stable_random_erasing.1']
  #allocation3 [shape = 'u8[512]{0}', space=smem, size = 0x200, scoped, tag = 'prefetched SMEM operand 0']
  %s0 = inlined_call_operand.vmem [shape: s32[6], index: 0, kind: input, shape index: {}]
  %s1 = inlined_call_operand.vmem [shape: f32[8,16,16], index: 1, kind: input, shape index: {}, may-alias: {1,2}]
  %s2 = inlined_call_operand.vmem [shape: f32[8,16,16], index: 2, kind: output, shape index: {}, may-alias: {1,2}]
  %s3 = sld [smem:[#allocation0]]
  $region37: #{stable_random_erasing.1} parent=0
    _
  %s5 = ssub.s32 1, %s3
  %s6 = scalar_select 0, %s5, %s3
  %s8 = sshll.u32 %s0, 4
  %s9 = int_to_ptr.vmem [resolvable:$true] %s8
  %11 = dma.vmem_to_smem %s9, 16, [#allocation3], [#allocation2]
  %13 = dma.done [#allocation2], 16
  %14 = sfence
  loop: start=0, step=1, limit=4
  $region2: #{stable_random_erasing.1} parent=0 // loop_pre_header
    _
  $region3: #{stable_random_erasing.1} parent=0 // loop_header
    %s16 = sphi 0, %s20
    %p17 = scmp.ge.s32.totalorder %s16, 4
    %s23 = sphi 0, %s35
    %s24 = sphi 0, %s31
    %s25 = sphi 0, %s23
    %s26 = sphi 0, %s24
    %s27 = sphi 0, %s25
    %s28 = sphi 0, %s26
    %s50 = sphi 0, %s52
    %s53 = sphi 0, %s50
    %s54 = sphi 0, %s53
    %s70 = sphi 0, %s54
    %s88 = sphi 0, %s90
    %s91 = sphi 0, %s88
    %s92 = sphi 0, %s91
    %s108 = sphi 0, %s92
  $region4: #{stable_random_erasing.1} parent=0 // loop_header_branch
    %19 = sbr.rel (%p17) target = $region8
  $region5: #{stable_random_erasing.1} parent=0 // loop_body
    %s21 = ssub.s32 %s16, 1
    %s22 = ssub.s32 %s16, 2
    %s29 = sadd.s32 1, %s24
    %p30 = scmp.ge.s32.totalorder %s29, 1
    %s31 = scalar_select %p30, 0, %s29
    %s32 = sadd.s32 1, %s23
    %s33 = scalar_select %p30, %s32, %s23
    %p34 = scmp.ge.s32.totalorder %s33, 2
    %s35 = scalar_select %p34, 0, %s33
    %s36 = sld [smem:[#allocation3]]
    %s37 = sadd.s32 %s36, %s24
    %s38 = sld [smem:[#allocation3 + $0x1]]
    %p39 = scmp.lt.s32.totalorder %s37, %s38
    %s40 = scalar_select %p39, %s37, %s38
    %s41 = sld [smem:[#allocation3]]
    %s42 = sadd.s32 %s41, %s31
    %s43 = sld [smem:[#allocation3 + $0x1]]
    %p44 = scmp.lt.s32.totalorder %s42, %s43
    %s45 = scalar_select %p44, %s42, %s43
    %s46 = ssub.s32 %s23, %s35
    %s47 = ssub.s32 %s40, %s45
    %s48 = sor.u32 %s46, %s47
    %p49 = scmp.eq.s32.totalorder %s48, 0
    %s51 = sadd.s32 %s50, 1
    %s52 = scalar_select %p49, %s50, %s51
    %p55 = pneg %p49
    %p56 = scmp.eq.s32.totalorder %s16, 1
    %p57 = por %p55, %p56
    %p58 = scmp.ne.s32.totalorder %s50, %s53
    %p59 = scmp.eq.s32.totalorder %s16, 0
    %p60 = por %p58, %p59
    %p61 = scmp.ne.s32.totalorder %s50, %s53
    %p62 = scmp.eq.s32.totalorder %s21, 1
    %p63 = por %p61, %p62
    %p64 = scmp.ne.s32.totalorder %s53, %s54
    %p65 = scmp.eq.s32.totalorder %s21, 0
    %p66 = por %p64, %p65
    %p67 = scmp.ne.s32.totalorder %s53, %s54
    %p68 = scmp.eq.s32.totalorder %s22, 1
    %p69 = por %p67, %p68
    %p71 = scmp.ne.s32.totalorder %s54, %s70
    %p72 = scmp.eq.s32.totalorder %s22, 0
    %p73 = por %p71, %p72
    %s74 = sld [smem:[#allocation3]]
    %s75 = sadd.s32 %s74, %s24
    %s76 = sld [smem:[#allocation3 + $0x1]]
    %p77 = scmp.lt.s32.totalorder %s75, %s76
    %s78 = scalar_select %p77, %s75, %s76
    %s79 = sld [smem:[#allocation3]]
    %s80 = sadd.s32 %s79, %s31
    %s81 = sld [smem:[#allocation3 + $0x1]]
    %p82 = scmp.lt.s32.totalorder %s80, %s81
    %s83 = scalar_select %p82, %s80, %s81
    %s84 = ssub.s32 %s23, %s35
    %s85 = ssub.s32 %s78, %s83
    %s86 = sor.u32 %s84, %s85
    %p87 = scmp.eq.s32.totalorder %s86, 0
    %s89 = sadd.s32 %s88, 1
    %s90 = scalar_select %p87, %s88, %s89
    %p93 = pneg %p87
    %p94 = scmp.eq.s32.totalorder %s16, 1
    %p95 = por %p93, %p94
    %p96 = scmp.ne.s32.totalorder %s88, %s91
    %p97 = scmp.eq.s32.totalorder %s16, 0
    %p98 = por %p96, %p97
    %p99 = scmp.ne.s32.totalorder %s88, %s91
    %p100 = scmp.eq.s32.totalorder %s21, 1
    %p101 = por %p99, %p100
    %p102 = scmp.ne.s32.totalorder %s91, %s92
    %p103 = scmp.eq.s32.totalorder %s21, 0
    %p104 = por %p102, %p103
    %p105 = scmp.ne.s32.totalorder %s91, %s92
    %p106 = scmp.eq.s32.totalorder %s22, 1
    %p107 = por %p105, %p106
    %p109 = scmp.ne.s32.totalorder %s92, %s108
    %p110 = scmp.eq.s32.totalorder %s22, 0
    %p111 = por %p109, %p110
    %p112 = scmp.le.s32.totalorder 1, %s16
    %p113 = scmp.lt.s32.totalorder %s16, 3
    %p114 = pnand %p112, %p113
    %p115 = pneg %p114
    // Predicated region
    $region9: #{stable_random_erasing.1} parent=5 // pred_check
      _
    $region10: #{stable_random_erasing.1} parent=5 // pred_check_branch
      %117 = sbr.rel (%p114) target = $region12
    $region11: #{stable_random_erasing.1} parent=5 // pred_region
      %s118 = ssub.s32 %s16, 1
    $region12: #{stable_random_erasing.1} parent=5 // pred_fallthru
      _
    %p119 = scmp.lt.s32.totalorder %s16, 2
    // Predicated region
    $region13: #{stable_random_erasing.1} parent=5 // pred_check
      %p120 = pneg %p119
    $region14: #{stable_random_erasing.1} parent=5 // pred_check_branch
      %122 = sbr.rel (%p120) target = $region16
    $region15: #{stable_random_erasing.1} parent=5 // pred_region
      // Predicated region
      $region17: #{stable_random_erasing.1} parent=15 // pred_check
        %p123 = pneg %p60
      $region18: #{stable_random_erasing.1} parent=15 // pred_check_branch
        %125 = sbr.rel (%p123) target = $region20
      $region19: #{stable_random_erasing.1} parent=15 // pred_region
        %s126 = sld [smem:[#allocation3]]
        %s127 = sadd.s32 %s126, %s24
        %s128 = sld [smem:[#allocation3 + $0x1]]
        %p129 = scmp.lt.s32.totalorder %s127, %s128
        %s130 = scalar_select %p129, %s127, %s128
        %s131 = smul.u32 4, %s23
        %s132 = smul.u32 2, %s130
        %p133 = scmp.lt.s32.totalorder %s131, 7
        %s134 = scalar_select %p133, %s131, 7
        %p135 = scmp.lt.s32.totalorder %s132, 1
        %s136 = scalar_select %p135, %s132, 1
        %s137 = smul.addr %s134, 2
        %s138 = sadd.s32 %s136, %s137
        %s139 = smul.addr %s138, 8
        %s140 = scalar_lea.vmem %s1, %s139
        %s141 = sld [smem:[#allocation3]]
        %s142 = sadd.s32 %s141, %s24
        %s143 = sld [smem:[#allocation3 + $0x1]]
        %p144 = scmp.lt.s32.totalorder %s142, %s143
        %s145 = scalar_select %p144, %s142, %s143
        %s146 = smul.u32 4, %s23
        %s147 = smul.u32 2, %s145
      $region20: #{stable_random_erasing.1} parent=15 // pred_fallthru
        _
    $region16: #{stable_random_erasing.1} parent=5 // pred_fallthru
      _
    %p148 = scmp.le.s32.totalorder 1, %s16
    %p149 = scmp.lt.s32.totalorder %s16, 3
    %p150 = pnand %p148, %p149
    %p151 = pneg %p150
    // Predicated region
    $region21: #{stable_random_erasing.1} parent=5 // pred_check
      _
    $region22: #{stable_random_erasing.1} parent=5 // pred_check_branch
      %153 = sbr.rel (%p150) target = $region24
    $region23: #{stable_random_erasing.1} parent=5 // pred_region
      %s154 = ssub.s32 %s16, 1
      %s155 = sld [smem:[#allocation3]]
      %s156 = sadd.s32 %s155, %s26
      %s157 = sld [smem:[#allocation3 + $0x1]]
      %p158 = scmp.lt.s32.totalorder %s156, %s157
      %s159 = scalar_select %p158, %s156, %s157
      %s160 = smul.u32 4, %s25
      %s161 = smul.u32 2, %s159
      %p162 = scmp.lt.s32.totalorder %s160, 7
      %s163 = scalar_select %p162, %s160, 7
      %p164 = scmp.lt.s32.totalorder %s161, 1
      %s165 = scalar_select %p164, %s161, 1
      %s166 = smul.addr %s163, 2
      %s167 = sadd.s32 %s165, %s166
      %s168 = smul.addr %s167, 8
      %s169 = scalar_lea.vmem %s1, %s168
      %p170 = pneg %p66
      %p171 = pneg %p63
      %p172 = pneg %p104
      %p173 = pneg %p101
      %s174 = sld [smem:[#allocation3]]
      %s175 = sadd.s32 %s174, %s26
      %s176 = sld [smem:[#allocation3 + $0x1]]
      %p177 = scmp.lt.s32.totalorder %s175, %s176
      %s178 = scalar_select %p177, %s175, %s176
      %s179 = smul.u32 4, %s25
      %s180 = smul.u32 2, %s178
      %p181 = scmp.lt.s32.totalorder %s179, 7
      %s182 = scalar_select %p181, %s179, 7
      %p183 = scmp.lt.s32.totalorder %s180, 1
      %s184 = scalar_select %p183, %s180, 1
      %s185 = smul.addr %s182, 2
      %s186 = sadd.s32 %s184, %s185
      %s187 = smul.addr %s186, 8
      %s188 = scalar_lea.vmem %s2, %s187
      %s189 = sld [smem:[#allocation3]]
      %s190 = sadd.s32 %s189, %s26
      %s191 = sld [smem:[#allocation3 + $0x1]]
      %p192 = scmp.lt.s32.totalorder %s190, %s191
      %s193 = scalar_select %p192, %s190, %s191
      %s194 = smul.u32 4, %s25
      %s195 = smul.u32 2, %s193
      %p196 = scmp.lt.s32.totalorder %s194, 7
      %s197 = scalar_select %p196, %s194, 7
      %p198 = scmp.lt.s32.totalorder %s195, 1
      %s199 = scalar_select %p198, %s195, 1
      %s200 = smul.addr %s197, 2
      %s201 = sadd.s32 %s199, %s200
      %s202 = smul.addr %s201, 8
      %s203 = scalar_lea.vmem %s1, %s202
      %s204 = sld [smem:[#allocation3]]
      %s205 = sadd.s32 %s204, %s26
      %s206 = sld [smem:[#allocation3 + $0x1]]
      %p207 = scmp.lt.s32.totalorder %s205, %s206
      %s208 = scalar_select %p207, %s205, %s206
      %s209 = smul.u32 4, %s25
      %s210 = smul.u32 2, %s208
      %s211 = sld [smem:[#allocation3]]
      %s212 = sadd.s32 %s211, %s26
      %s213 = sld [smem:[#allocation3 + $0x1]]
      %p214 = scmp.lt.s32.totalorder %s212, %s213
      %s215 = scalar_select %p214, %s212, %s213
      %s216 = smul.u32 4, %s25
      %s217 = smul.u32 2, %s215
      %p218 = scmp.lt.s32.totalorder %s216, 7
      %s219 = scalar_select %p218, %s216, 7
      %p220 = scmp.lt.s32.totalorder %s217, 1
      %s221 = scalar_select %p220, %s217, 1
      %s222 = smul.addr %s219, 2
      %s223 = sadd.s32 %s221, %s222
      %s224 = smul.addr %s223, 8
      %s225 = scalar_lea.vmem %s2, %s224
      %s226 = sld [smem:[#allocation3]]
      %s227 = sadd.s32 %s226, %s26
      %s228 = sld [smem:[#allocation3 + $0x1]]
      %p229 = scmp.lt.s32.totalorder %s227, %s228
      %s230 = scalar_select %p229, %s227, %s228
      %s231 = smul.u32 4, %s25
      %s232 = smul.u32 2, %s230
      %s233 = sld [smem:[#allocation3]]
      %s234 = sadd.s32 %s233, %s26
      %s235 = sld [smem:[#allocation3 + $0x1]]
      %p236 = scmp.lt.s32.totalorder %s234, %s235
      %s237 = scalar_select %p236, %s234, %s235
      %s238 = smul.u32 %s237, 16
      %s239 = sld [smem:[#allocation3 + $0x2]]
      %s240 = sld [smem:[#allocation3 + $0x3]]
      %s241 = sld [smem:[#allocation3 + $0x4]]
      %s242 = sld [smem:[#allocation3 + $0x5]]
      %v243 = vlaneseq
      %v244 = vshrl.u32 %v243, 7
      %v245 = vadd.s32 %v244, 8
      %v246 = vstv %s238
      %v247 = vadd.s32 %v246, %v244
      %v248 = vadd.s32 %v246, %v245
      %v249 = vlaneseq
      %v250 = vand.u32 %v249, 127
      %v251 = vstv %s239
      %vm252 = vcmp.ge.s32.totalorder %v247, %v251
      %vm253 = vcmp.ge.s32.totalorder %v248, %v251
      %s254 = sadd.s32 %s239, %s241
      %v255 = vstv %s254
      %vm256 = vcmp.lt.s32.totalorder %v247, %v255
      %vm257 = vcmp.lt.s32.totalorder %v248, %v255
      %vm258 = vmand %vm252, %vm256
      %vm259 = vmand %vm253, %vm257
      %v260 = vstv %s240
      %vm261 = vcmp.ge.s32.totalorder %v250, %v260
      %vm262 = vmand %vm258, %vm261
      %vm263 = vmand %vm259, %vm261
      %s264 = sadd.s32 %s240, %s242
      %v265 = vstv %s264
      %vm266 = vcmp.lt.s32.totalorder %v250, %v265
      %vm267 = vmand %vm262, %vm266
      %vm268 = vmand %vm263, %vm266
      %v269 = vld [vmem:[%s203] sm:$0xff]
      %v270 = vld [vmem:[%s203 + $0x8] sm:$0xff]
      %v271 = vld [vmem:[%s203 + $0x10] sm:$0xff]
      %v272 = vld [vmem:[%s203 + $0x18] sm:$0xff]
      %v273 = vld [vmem:[%s203 + $0x20] sm:$0xff]
      %v274 = vld [vmem:[%s203 + $0x28] sm:$0xff]
      %v275 = vld [vmem:[%s203 + $0x30] sm:$0xff]
      %v276 = vld [vmem:[%s203 + $0x38] sm:$0xff]
      %v277 = vsel %vm267, 1, 0
      %v278 = vsel %vm268, 1, 0
      %vm279 = vcmp.eq.s32.totalorder %v277, 1
      %vm280 = vcmp.eq.s32.totalorder %v278, 1
      %v281 = vsel %vm279, 0.0, %v269
      %v282 = vsel %vm280, 0.0, %v270
      %v283 = vsel %vm279, 0.0, %v271
      %v284 = vsel %vm280, 0.0, %v272
      %v285 = vsel %vm279, 0.0, %v273
      %v286 = vsel %vm280, 0.0, %v274
      %v287 = vsel %vm279, 0.0, %v275
      %v288 = vsel %vm280, 0.0, %v276
      %vm289 = vcmask 130048
      %290 = vst.msk [vmem:[%s225] sm:$0xff] %vm289, %v281
      %291 = vst.msk [vmem:[%s225 + $0x8] sm:$0xff] %vm289, %v282
      %292 = vst.msk [vmem:[%s225 + $0x10] sm:$0xff] %vm289, %v283
      %293 = vst.msk [vmem:[%s225 + $0x18] sm:$0xff] %vm289, %v284
      %294 = vst.msk [vmem:[%s225 + $0x20] sm:$0xff] %vm289, %v285
      %295 = vst.msk [vmem:[%s225 + $0x28] sm:$0xff] %vm289, %v286
      %296 = vst.msk [vmem:[%s225 + $0x30] sm:$0xff] %vm289, %v287
      %297 = vst.msk [vmem:[%s225 + $0x38] sm:$0xff] %vm289, %v288
      %s298 = sld [smem:[#allocation3]]
      %s299 = sadd.s32 %s298, %s26
      %s300 = sld [smem:[#allocation3 + $0x1]]
      %p301 = scmp.lt.s32.totalorder %s299, %s300
      %s302 = scalar_select %p301, %s299, %s300
      %s303 = smul.u32 4, %s25
      %s304 = smul.u32 2, %s302
      %p305 = scmp.lt.s32.totalorder %s303, 7
      %s306 = scalar_select %p305, %s303, 7
      %p307 = scmp.lt.s32.totalorder %s304, 1
      %s308 = scalar_select %p307, %s304, 1
      %s309 = smul.addr %s306, 2
      %s310 = sadd.s32 %s308, %s309
      %s311 = smul.addr %s310, 8
      %s312 = scalar_lea.vmem %s2, %s311
      // Predicated region
      $region25: #{stable_random_erasing.1} parent=23 // pred_check
        %p313 = pneg %p101
      $region26: #{stable_random_erasing.1} parent=23 // pred_check_branch
        %315 = sbr.rel (%p313) target = $region28
      $region27: #{stable_random_erasing.1} parent=23 // pred_region
        %s316 = sld [smem:[#allocation3]]
        %s317 = sadd.s32 %s316, %s26
        %s318 = sld [smem:[#allocation3 + $0x1]]
        %p319 = scmp.lt.s32.totalorder %s317, %s318
        %s320 = scalar_select %p319, %s317, %s318
        %s321 = smul.u32 4, %s25
        %s322 = smul.u32 2, %s320
      $region28: #{stable_random_erasing.1} parent=23 // pred_fallthru
        _
    $region24: #{stable_random_erasing.1} parent=5 // pred_fallthru
      _
    %p323 = scmp.le.s32.totalorder 2, %s16
    // Predicated region
    $region29: #{stable_random_erasing.1} parent=5 // pred_check
      %p324 = pneg %p323
    $region30: #{stable_random_erasing.1} parent=5 // pred_check_branch
      %326 = sbr.rel (%p324) target = $region32
    $region31: #{stable_random_erasing.1} parent=5 // pred_region
      %s327 = ssub.s32 %s16, 2
      // Predicated region
      $region33: #{stable_random_erasing.1} parent=31 // pred_check
        %p328 = pneg %p107
      $region34: #{stable_random_erasing.1} parent=31 // pred_check_branch
        %330 = sbr.rel (%p328) target = $region36
      $region35: #{stable_random_erasing.1} parent=31 // pred_region
        %s331 = sld [smem:[#allocation3]]
        %s332 = sadd.s32 %s331, %s28
        %s333 = sld [smem:[#allocation3 + $0x1]]
        %p334 = scmp.lt.s32.totalorder %s332, %s333
        %s335 = scalar_select %p334, %s332, %s333
        %s336 = smul.u32 4, %s27
        %s337 = smul.u32 2, %s335
        %p338 = scmp.lt.s32.totalorder %s336, 7
        %s339 = scalar_select %p338, %s336, 7
        %p340 = scmp.lt.s32.totalorder %s337, 1
        %s341 = scalar_select %p340, %s337, 1
        %s342 = smul.addr %s339, 2
        %s343 = sadd.s32 %s341, %s342
        %s344 = smul.addr %s343, 8
        %s345 = scalar_lea.vmem %s2, %s344
      $region36: #{stable_random_erasing.1} parent=31 // pred_fallthru
        _
    $region32: #{stable_random_erasing.1} parent=5 // pred_fallthru
      _
  $region6: #{stable_random_erasing.1} parent=0 // loop_footer
    %s20 = sadd.s32 1, %s16
  $region7: #{stable_random_erasing.1} parent=0 // loop_footer_branch
    %15 = sbr.rel target = $region3
  $region8: #{stable_random_erasing.1} parent=0 // loop_exit
    _

</llo_original>
